<compile_context>
chip_gen: v7x
topology: tpu7x:2x2x1
jax: 0.10.0
libtpu: 0.0.40
codegen_flags: <defaults>
</compile_context>

<pallas_src>
import functools

import jax
import jax.numpy as jnp
from jax.experimental import pallas as pl
from jax.experimental.pallas import tpu as pltpu

EPS = 1e-5


# ---------------------------------------------------------------------------
# Fully fused Block kernel (single invocation, channel-major, batch folded into lanes)
# ---------------------------------------------------------------------------
def _block_kernel(xph_ref, cst_ref, msk_ref, *w_out_refs,
                  inp, oup, blocks, stride, Wo, L):
    """Fused Block forward.

    xph_ref : (s*s, inp, L)   polyphase-split BN-input, L = N*Ho*Wo (lane axis).
    cst_ref : (inp + oup*(blocks-1), 11) per-channel [bn_scale, bn_bias, 9 dw taps].
    msk_ref : (9, L) combined edge-validity masks, row = (dh+1)*3 + (dw+1).
    w_out_refs : `blocks` pre-sliced 1x1 weights (w0:(dim,inp), wi:(dim-(i+1)*oup,oup)),
                 then the output ref (oup, L).
    """
    w_refs = w_out_refs[:blocks]
    o_ref = w_out_refs[blocks]

    mask_cache = {}

    def tap_mask(dh, dw):
        key = (dh, dw)
        if key not in mask_cache:                       # each mask row loaded once per trace
            r = (dh + 1) * 3 + (dw + 1)
            mask_cache[key] = msk_ref[r:r + 1, :]       # (1, L)
        return mask_cache[key]

    def shift(v, sft):
        # y[:, i] = v[:, i + sft]; wrapped lanes are zeroed by the validity mask.
        if sft == 0:
            return v
        return pltpu.roll(v, (-sft) % L, axis=1)        # XLU rotate — free next to VPU math

    def dw3x3(phases, taps, s):
        # phases: s*s arrays (C, L), already at output resolution; taps: (C, 9) row-major (kh, kw)
        acc = None
        for kh in range(3):
            for kw in range(3):
                ph, pw = (kh - 1) % s, (kw - 1) % s      # polyphase component
                dh, dw = (kh - 1) // s, (kw - 1) // s    # shift at output resolution
                v = shift(phases[ph * s + pw], dh * Wo + dw)
                if (dh, dw) != (0, 0):
                    v = v * tap_mask(dh, dw)
                term = v * taps[:, kh * 3 + kw:kh * 3 + kw + 1]
                acc = term if acc is None else acc + term
        return acc

    # ---- stage 0: BN0 + ReLU + depthwise3x3(stride) + 1x1 conv with w[:, :inp] ----
    c0 = cst_ref[0:inp, :]
    s0, b0, k0 = c0[:, 0:1], c0[:, 1:2], c0[:, 2:11]
    phases0 = [jnp.maximum(xph_ref[p] * s0 + b0, 0.0) for p in range(stride * stride)]
    d0 = dw3x3(phases0, k0, stride)                                   # (inp, L)
    x = jnp.dot(w_refs[0][...], d0, preferred_element_type=jnp.float32)  # (dim, L)

    # ---- chained micro-blocks (statically unrolled; state stays in vregs/VMEM) ----
    for i in range(blocks - 1):
        ci = cst_ref[inp + i * oup: inp + (i + 1) * oup, :]
        si, bi, ki = ci[:, 0:1], ci[:, 1:2], ci[:, 2:11]
        xa = jnp.maximum(x[:oup, :] * si + bi, 0.0)                   # BN_{i+1} + ReLU
        da = dw3x3([xa], ki, 1)                                       # (oup, L)
        x = x[oup:, :] + jnp.dot(w_refs[i + 1][...], da,
                                 preferred_element_type=jnp.float32)

    o_ref[...] = x.astype(o_ref.dtype)                                # (oup, L) lane-dense store


# ---------------------------------------------------------------------------
# Wrapper: layout plumbing (polyphase + batch fold, BN folding, masks, weight slices)
# ---------------------------------------------------------------------------
def block_forward(x_nchw, params, inp, oup, blocks, stride):
    N, C, H, W = x_nchw.shape
    assert C == inp
    s = stride
    # TODO(synk): odd H/W with stride>1 needs ragged polyphase handling (PyTorch pad=1 path).
    assert H % s == 0 and W % s == 0, "polyphase stride path expects stride | H, W"
    Ho, Wo = H // s, W // s
    M = Ho * Wo
    L = N * M                     # lane axis (2*64 = 128 here → fully lane-dense)
    S2 = s * s

    x = x_nchw.astype(jnp.float32)
    # One layout op: polyphase split + channel-major + batch folded into the lane axis.
    #   xph[ph*s+pw, c, n*M + ho*Wo + wo] = x[n, c, ho*s+ph, wo*s+pw]
    xph = (x.reshape(N, inp, Ho, s, Wo, s)
            .transpose(3, 5, 1, 0, 2, 4)
            .reshape(S2, inp, L))
    # TODO(synk): move this split in-kernel (or use allow_input_fusion) to drop the one extra
    #             HBM round trip; at these tiny shapes it is noise, at scale it matters.

    def fold(g, b, m, v):         # eval-mode BatchNorm → per-channel scale / bias
        sc = g * jax.lax.rsqrt(v + EPS)
        return sc, b - m * sc

    # packed per-channel constants: [scale | bias | 9 depthwise taps]
    rows = []
    s0, b0 = fold(*params["bn"][0])
    rows.append(jnp.concatenate(
        [s0[:, None], b0[:, None], params["dw_down_oihw"].reshape(inp, 9)], axis=1))
    for i in range(blocks - 1):
        si, bi = fold(*params["bn"][i + 1])
        ki = params["dw_conv_oihw"][i * oup:(i + 1) * oup].reshape(oup, 9)
        rows.append(jnp.concatenate([si[:, None], bi[:, None], ki], axis=1))
    cst = jnp.concatenate(rows, axis=0).astype(jnp.float32)           # (inp+oup*(blocks-1), 11)

    # combined edge-validity masks at output resolution, one row per tap offset (dh, dw)
    hh = jnp.arange(Ho, dtype=jnp.int32)
    ww = jnp.arange(Wo, dtype=jnp.int32)
    mrows = []
    for dh in (-1, 0, 1):
        vh = ((hh + dh >= 0) & (hh + dh < Ho)).astype(jnp.float32)
        for dw in (-1, 0, 1):
            vw = ((ww + dw >= 0) & (ww + dw < Wo)).astype(jnp.float32)
            m2 = vh[:, None] * vw[None, :]                            # (Ho, Wo)
            mrows.append(jnp.broadcast_to(m2[None], (N, Ho, Wo)).reshape(L))
    masks = jnp.stack(mrows, axis=0)                                  # (9, L)

    # pre-sliced 1x1 weights (static host slices → clean MXU tiles, no in-kernel selects)
    w = params["w"].astype(jnp.float32)
    w_list = [w[:, :inp]]
    for i in range(blocks - 1):
        w_list.append(w[(i + 1) * oup:, inp + i * oup:inp + (i + 1) * oup])

    kernel = functools.partial(_block_kernel, inp=inp, oup=oup, blocks=blocks,
                               stride=s, Wo=Wo, L=L)
    vmem = pltpu.MemorySpace.VMEM
    out = pl.pallas_call(
        kernel,
        out_shape=jax.ShapeDtypeStruct((oup, L), jnp.float32),
        in_specs=[pl.BlockSpec(memory_space=vmem)] * (3 + blocks),
        out_specs=pl.BlockSpec(memory_space=vmem),
    )(xph, cst, masks, *w_list)

    # (oup, N*Ho*Wo) → NCHW
    return out.reshape(oup, N, Ho, Wo).transpose(1, 0, 2, 3)


# ---------------------------------------------------------------------------
# Pure-JAX reference (XLA convs) for verification
# ---------------------------------------------------------------------------
def ref_forward(x_nchw, params, inp, oup, blocks, stride):
    def bn_relu(x, g, b, m, v):
        xn = ((x - m[None, :, None, None]) * jax.lax.rsqrt(v + EPS)[None, :, None, None]
              * g[None, :, None, None] + b[None, :, None, None])
        return jnp.maximum(xn, 0.0)

    def dwconv(x, w4, s):    # w4: (C, 1, 3, 3) PyTorch OIHW, groups=C
        return jax.lax.conv_general_dilated(
            x, w4, window_strides=(s, s), padding=((1, 1), (1, 1)),
            dimension_numbers=("NCHW", "OIHW", "NCHW"),
            feature_group_count=x.shape[1])

    def pw(x, w2):           # w2: (Cout, Cin) 1x1 conv
        return jnp.einsum("nchw,oc->nohw", x, w2)

    g0, b0, m0, v0 = params["bn"][0]
    x = dwconv(bn_relu(x_nchw, g0, b0, m0, v0), params["dw_down_oihw"], stride)
    w = params["w"]
    x = pw(x, w[:, :inp])
    for i in range(blocks - 1):
        xa = x[:, :oup]
        g, b, m, v = params["bn"][i + 1]
        xa = bn_relu(xa, g, b, m, v)
        xa = dwconv(xa, params["dw_conv_oihw"][i * oup:(i + 1) * oup], 1)
        xa = pw(xa, w[(i + 1) * oup:, inp + i * oup:inp + (i + 1) * oup])
        x = x[:, oup:] + xa
    return x


# ---------------------------------------------------------------------------
# Deterministic parameter construction + run
# ---------------------------------------------------------------------------
def make_params(key, inp, oup, blocks):
    keys = jax.random.split(key, 4 * blocks + 3)
    kit = iter(keys)
    bn = []
    for c in [inp] + [oup] * (blocks - 1):
        gamma = 1.0 + 0.1 * jax.random.normal(next(kit), (c,), jnp.float32)
        beta = 0.1 * jax.random.normal(next(kit), (c,), jnp.float32)
        mean = 0.1 * jax.random.normal(next(kit), (c,), jnp.float32)
        var = jax.random.uniform(next(kit), (c,), jnp.float32, 0.5, 1.5)
        bn.append((gamma, beta, mean, var))

    dw_down_oihw = 0.2 * jax.random.normal(next(kit), (inp, 1, 3, 3), jnp.float32)
    dw_conv_oihw = 0.2 * jax.random.normal(next(kit), (oup * (blocks - 1), 1, 3, 3),
                                           jnp.float32)
    # graph weight, used as a 1x1 conv: (oup*blocks, inp + oup*(blocks-1))
    w = 0.2 * jax.random.normal(next(kit), (oup * blocks, inp + oup * (blocks - 1)),
                                jnp.float32)
    return {"bn": bn, "w": w, "dw_down_oihw": dw_down_oihw, "dw_conv_oihw": dw_conv_oihw}


if __name__ == "__main__":
    inp, oup, blocks, stride = 8, 8, 3, 2
    N, H, W = 2, 16, 16                     # → L = N * (H//2) * (W//2) = 128 lanes

    root = jax.random.PRNGKey(0)
    kx, kp = jax.random.split(root)
    x = jax.random.normal(kx, (N, inp, H, W), jnp.float32)            # NCHW like PyTorch
    params = make_params(kp, inp, oup, blocks)

    out = jax.block_until_ready(block_forward(x, params, inp, oup, blocks, stride))
    ref = jax.block_until_ready(ref_forward(x, params, inp, oup, blocks, stride))

    assert out.shape == ref.shape == (N, oup, H // stride, W // stride), (out.shape, ref.shape)
    err = float(jnp.max(jnp.abs(out - ref)))
    assert jnp.allclose(out, ref, atol=1e-2, rtol=1e-2), err
    print("KERNEL_OK")
</pallas_src>

<mosaic_0001>
module attributes {stable_mosaic.version = 11 : i64} {
  func.func @_block_kernel(%arg0: memref<4x8x128xf32, #tpu.memory_space<vmem>>, %arg1: memref<24x11xf32, #tpu.memory_space<vmem>>, %arg2: memref<9x128xf32, #tpu.memory_space<vmem>>, %arg3: memref<24x8xf32, #tpu.memory_space<vmem>>, %arg4: memref<16x8xf32, #tpu.memory_space<vmem>>, %arg5: memref<8x8xf32, #tpu.memory_space<vmem>>, %arg6: memref<8x128xf32, #tpu.memory_space<vmem>>) attributes {dimension_semantics = [], scalar_prefetch = 0 : i64, scratch_operands = 0 : i64, tpu.core_type = #tpu.core_type<tc>} {
    %c0 = arith.constant 0 : index
    %c0_0 = arith.constant 0 : index
    %0 = vector.load %arg1[%c0, %c0_0] : memref<24x11xf32, #tpu.memory_space<vmem>>, vector<8x11xf32>
    %1 = vector.extract_strided_slice %0 {offsets = [0, 0], sizes = [8, 1], strides = [1, 1]} : vector<8x11xf32> to vector<8x1xf32>
    %2 = vector.extract_strided_slice %0 {offsets = [0, 1], sizes = [8, 1], strides = [1, 1]} : vector<8x11xf32> to vector<8x1xf32>
    %3 = vector.extract_strided_slice %0 {offsets = [0, 2], sizes = [8, 9], strides = [1, 1]} : vector<8x11xf32> to vector<8x9xf32>
    %c0_1 = arith.constant 0 : index
    %c0_2 = arith.constant 0 : index
    %c0_3 = arith.constant 0 : index
    %4 = vector.load %arg0[%c0_1, %c0_2, %c0_3] : memref<4x8x128xf32, #tpu.memory_space<vmem>>, vector<1x8x128xf32>
    %5 = vector.shape_cast %4 : vector<1x8x128xf32> to vector<8x128xf32>
    %6 = vector.broadcast %1 : vector<8x1xf32> to vector<8x128xf32>
    %7 = arith.mulf %5, %6 : vector<8x128xf32>
    %8 = vector.broadcast %2 : vector<8x1xf32> to vector<8x128xf32>
    %9 = arith.addf %7, %8 : vector<8x128xf32>
    %cst = arith.constant 0.000000e+00 : f32
    %10 = vector.broadcast %cst : f32 to vector<8x128xf32>
    %11 = arith.maximumf %9, %10 : vector<8x128xf32>
    %c1 = arith.constant 1 : index
    %c0_4 = arith.constant 0 : index
    %c0_5 = arith.constant 0 : index
    %12 = vector.load %arg0[%c1, %c0_4, %c0_5] : memref<4x8x128xf32, #tpu.memory_space<vmem>>, vector<1x8x128xf32>
    %13 = vector.shape_cast %12 : vector<1x8x128xf32> to vector<8x128xf32>
    %14 = vector.broadcast %1 : vector<8x1xf32> to vector<8x128xf32>
    %15 = arith.mulf %13, %14 : vector<8x128xf32>
    %16 = vector.broadcast %2 : vector<8x1xf32> to vector<8x128xf32>
    %17 = arith.addf %15, %16 : vector<8x128xf32>
    %cst_6 = arith.constant 0.000000e+00 : f32
    %18 = vector.broadcast %cst_6 : f32 to vector<8x128xf32>
    %19 = arith.maximumf %17, %18 : vector<8x128xf32>
    %c2 = arith.constant 2 : index
    %c0_7 = arith.constant 0 : index
    %c0_8 = arith.constant 0 : index
    %20 = vector.load %arg0[%c2, %c0_7, %c0_8] : memref<4x8x128xf32, #tpu.memory_space<vmem>>, vector<1x8x128xf32>
    %21 = vector.shape_cast %20 : vector<1x8x128xf32> to vector<8x128xf32>
    %22 = vector.broadcast %1 : vector<8x1xf32> to vector<8x128xf32>
    %23 = arith.mulf %21, %22 : vector<8x128xf32>
    %24 = vector.broadcast %2 : vector<8x1xf32> to vector<8x128xf32>
    %25 = arith.addf %23, %24 : vector<8x128xf32>
    %cst_9 = arith.constant 0.000000e+00 : f32
    %26 = vector.broadcast %cst_9 : f32 to vector<8x128xf32>
    %27 = arith.maximumf %25, %26 : vector<8x128xf32>
    %c3 = arith.constant 3 : index
    %c0_10 = arith.constant 0 : index
    %c0_11 = arith.constant 0 : index
    %28 = vector.load %arg0[%c3, %c0_10, %c0_11] : memref<4x8x128xf32, #tpu.memory_space<vmem>>, vector<1x8x128xf32>
    %29 = vector.shape_cast %28 : vector<1x8x128xf32> to vector<8x128xf32>
    %30 = vector.broadcast %1 : vector<8x1xf32> to vector<8x128xf32>
    %31 = arith.mulf %29, %30 : vector<8x128xf32>
    %32 = vector.broadcast %2 : vector<8x1xf32> to vector<8x128xf32>
    %33 = arith.addf %31, %32 : vector<8x128xf32>
    %cst_12 = arith.constant 0.000000e+00 : f32
    %34 = vector.broadcast %cst_12 : f32 to vector<8x128xf32>
    %35 = arith.maximumf %33, %34 : vector<8x128xf32>
    %c9_i32 = arith.constant 9 : i32
    %36 = tpu.dynamic_rotate %35 by %c9_i32 dim 1 : vector<8x128xf32>, i32 -> vector<8x128xf32>
    %c0_13 = arith.constant 0 : index
    %c0_14 = arith.constant 0 : index
    %37 = vector.load %arg2[%c0_13, %c0_14] : memref<9x128xf32, #tpu.memory_space<vmem>>, vector<1x128xf32>
    %38 = vector.broadcast %37 : vector<1x128xf32> to vector<8x128xf32>
    %39 = arith.mulf %36, %38 : vector<8x128xf32>
    %40 = vector.extract_strided_slice %3 {offsets = [0, 0], sizes = [8, 1], strides = [1, 1]} : vector<8x9xf32> to vector<8x1xf32>
    %41 = vector.broadcast %40 : vector<8x1xf32> to vector<8x128xf32>
    %42 = arith.mulf %39, %41 : vector<8x128xf32>
    %c8_i32 = arith.constant 8 : i32
    %43 = tpu.dynamic_rotate %27 by %c8_i32 dim 1 : vector<8x128xf32>, i32 -> vector<8x128xf32>
    %c1_15 = arith.constant 1 : index
    %c0_16 = arith.constant 0 : index
    %44 = vector.load %arg2[%c1_15, %c0_16] : memref<9x128xf32, #tpu.memory_space<vmem>>, vector<1x128xf32>
    %45 = vector.broadcast %44 : vector<1x128xf32> to vector<8x128xf32>
    %46 = arith.mulf %43, %45 : vector<8x128xf32>
    %47 = vector.extract_strided_slice %3 {offsets = [0, 1], sizes = [8, 1], strides = [1, 1]} : vector<8x9xf32> to vector<8x1xf32>
    %48 = vector.broadcast %47 : vector<8x1xf32> to vector<8x128xf32>
    %49 = arith.mulf %46, %48 : vector<8x128xf32>
    %50 = arith.addf %42, %49 : vector<8x128xf32>
    %c8_i32_17 = arith.constant 8 : i32
    %51 = tpu.dynamic_rotate %35 by %c8_i32_17 dim 1 : vector<8x128xf32>, i32 -> vector<8x128xf32>
    %52 = vector.broadcast %44 : vector<1x128xf32> to vector<8x128xf32>
    %53 = arith.mulf %51, %52 : vector<8x128xf32>
    %54 = vector.extract_strided_slice %3 {offsets = [0, 2], sizes = [8, 1], strides = [1, 1]} : vector<8x9xf32> to vector<8x1xf32>
    %55 = vector.broadcast %54 : vector<8x1xf32> to vector<8x128xf32>
    %56 = arith.mulf %53, %55 : vector<8x128xf32>
    %57 = arith.addf %50, %56 : vector<8x128xf32>
    %c1_i32 = arith.constant 1 : i32
    %58 = tpu.dynamic_rotate %19 by %c1_i32 dim 1 : vector<8x128xf32>, i32 -> vector<8x128xf32>
    %c3_18 = arith.constant 3 : index
    %c0_19 = arith.constant 0 : index
    %59 = vector.load %arg2[%c3_18, %c0_19] : memref<9x128xf32, #tpu.memory_space<vmem>>, vector<1x128xf32>
    %60 = vector.broadcast %59 : vector<1x128xf32> to vector<8x128xf32>
    %61 = arith.mulf %58, %60 : vector<8x128xf32>
    %62 = vector.extract_strided_slice %3 {offsets = [0, 3], sizes = [8, 1], strides = [1, 1]} : vector<8x9xf32> to vector<8x1xf32>
    %63 = vector.broadcast %62 : vector<8x1xf32> to vector<8x128xf32>
    %64 = arith.mulf %61, %63 : vector<8x128xf32>
    %65 = arith.addf %57, %64 : vector<8x128xf32>
    %66 = vector.extract_strided_slice %3 {offsets = [0, 4], sizes = [8, 1], strides = [1, 1]} : vector<8x9xf32> to vector<8x1xf32>
    %67 = vector.broadcast %66 : vector<8x1xf32> to vector<8x128xf32>
    %68 = arith.mulf %11, %67 : vector<8x128xf32>
    %69 = arith.addf %65, %68 : vector<8x128xf32>
    %70 = vector.extract_strided_slice %3 {offsets = [0, 5], sizes = [8, 1], strides = [1, 1]} : vector<8x9xf32> to vector<8x1xf32>
    %71 = vector.broadcast %70 : vector<8x1xf32> to vector<8x128xf32>
    %72 = arith.mulf %19, %71 : vector<8x128xf32>
    %73 = arith.addf %69, %72 : vector<8x128xf32>
    %c1_i32_20 = arith.constant 1 : i32
    %74 = tpu.dynamic_rotate %35 by %c1_i32_20 dim 1 : vector<8x128xf32>, i32 -> vector<8x128xf32>
    %75 = vector.broadcast %59 : vector<1x128xf32> to vector<8x128xf32>
    %76 = arith.mulf %74, %75 : vector<8x128xf32>
    %77 = vector.extract_strided_slice %3 {offsets = [0, 6], sizes = [8, 1], strides = [1, 1]} : vector<8x9xf32> to vector<8x1xf32>
    %78 = vector.broadcast %77 : vector<8x1xf32> to vector<8x128xf32>
    %79 = arith.mulf %76, %78 : vector<8x128xf32>
    %80 = arith.addf %73, %79 : vector<8x128xf32>
    %81 = vector.extract_strided_slice %3 {offsets = [0, 7], sizes = [8, 1], strides = [1, 1]} : vector<8x9xf32> to vector<8x1xf32>
    %82 = vector.broadcast %81 : vector<8x1xf32> to vector<8x128xf32>
    %83 = arith.mulf %27, %82 : vector<8x128xf32>
    %84 = arith.addf %80, %83 : vector<8x128xf32>
    %85 = vector.extract_strided_slice %3 {offsets = [0, 8], sizes = [8, 1], strides = [1, 1]} : vector<8x9xf32> to vector<8x1xf32>
    %86 = vector.broadcast %85 : vector<8x1xf32> to vector<8x128xf32>
    %87 = arith.mulf %35, %86 : vector<8x128xf32>
    %88 = arith.addf %84, %87 : vector<8x128xf32>
    %c0_21 = arith.constant 0 : index
    %c0_22 = arith.constant 0 : index
    %89 = vector.load %arg3[%c0_21, %c0_22] : memref<24x8xf32, #tpu.memory_space<vmem>>, vector<24x8xf32>
    %cst_23 = arith.constant dense<0.000000e+00> : vector<24x128xf32>
    %90 = tpu.matmul %89, %88, %cst_23 {dimension_numbers = #tpu.dot_dimension_numbers<[1], [0], [0], [1], [0, 0, 1, 1], [], []>} : vector<24x8xf32>, vector<8x128xf32>, vector<24x128xf32> -> vector<24x128xf32>
    %c8 = arith.constant 8 : index
    %c0_24 = arith.constant 0 : index
    %91 = vector.load %arg1[%c8, %c0_24] : memref<24x11xf32, #tpu.memory_space<vmem>>, vector<8x11xf32>
    %92 = vector.extract_strided_slice %91 {offsets = [0, 0], sizes = [8, 1], strides = [1, 1]} : vector<8x11xf32> to vector<8x1xf32>
    %93 = vector.extract_strided_slice %91 {offsets = [0, 1], sizes = [8, 1], strides = [1, 1]} : vector<8x11xf32> to vector<8x1xf32>
    %94 = vector.extract_strided_slice %91 {offsets = [0, 2], sizes = [8, 9], strides = [1, 1]} : vector<8x11xf32> to vector<8x9xf32>
    %95 = vector.extract_strided_slice %90 {offsets = [0, 0], sizes = [8, 128], strides = [1, 1]} : vector<24x128xf32> to vector<8x128xf32>
    %96 = vector.broadcast %92 : vector<8x1xf32> to vector<8x128xf32>
    %97 = arith.mulf %95, %96 : vector<8x128xf32>
    %98 = vector.broadcast %93 : vector<8x1xf32> to vector<8x128xf32>
    %99 = arith.addf %97, %98 : vector<8x128xf32>
    %cst_25 = arith.constant 0.000000e+00 : f32
    %100 = vector.broadcast %cst_25 : f32 to vector<8x128xf32>
    %101 = arith.maximumf %99, %100 : vector<8x128xf32>
    %c9_i32_26 = arith.constant 9 : i32
    %102 = tpu.dynamic_rotate %101 by %c9_i32_26 dim 1 : vector<8x128xf32>, i32 -> vector<8x128xf32>
    %103 = vector.broadcast %37 : vector<1x128xf32> to vector<8x128xf32>
    %104 = arith.mulf %102, %103 : vector<8x128xf32>
    %105 = vector.extract_strided_slice %94 {offsets = [0, 0], sizes = [8, 1], strides = [1, 1]} : vector<8x9xf32> to vector<8x1xf32>
    %106 = vector.broadcast %105 : vector<8x1xf32> to vector<8x128xf32>
    %107 = arith.mulf %104, %106 : vector<8x128xf32>
    %c8_i32_27 = arith.constant 8 : i32
    %108 = tpu.dynamic_rotate %101 by %c8_i32_27 dim 1 : vector<8x128xf32>, i32 -> vector<8x128xf32>
    %109 = vector.broadcast %44 : vector<1x128xf32> to vector<8x128xf32>
    %110 = arith.mulf %108, %109 : vector<8x128xf32>
    %111 = vector.extract_strided_slice %94 {offsets = [0, 1], sizes = [8, 1], strides = [1, 1]} : vector<8x9xf32> to vector<8x1xf32>
    %112 = vector.broadcast %111 : vector<8x1xf32> to vector<8x128xf32>
    %113 = arith.mulf %110, %112 : vector<8x128xf32>
    %114 = arith.addf %107, %113 : vector<8x128xf32>
    %c7_i32 = arith.constant 7 : i32
    %115 = tpu.dynamic_rotate %101 by %c7_i32 dim 1 : vector<8x128xf32>, i32 -> vector<8x128xf32>
    %c2_28 = arith.constant 2 : index
    %c0_29 = arith.constant 0 : index
    %116 = vector.load %arg2[%c2_28, %c0_29] : memref<9x128xf32, #tpu.memory_space<vmem>>, vector<1x128xf32>
    %117 = vector.broadcast %116 : vector<1x128xf32> to vector<8x128xf32>
    %118 = arith.mulf %115, %117 : vector<8x128xf32>
    %119 = vector.extract_strided_slice %94 {offsets = [0, 2], sizes = [8, 1], strides = [1, 1]} : vector<8x9xf32> to vector<8x1xf32>
    %120 = vector.broadcast %119 : vector<8x1xf32> to vector<8x128xf32>
    %121 = arith.mulf %118, %120 : vector<8x128xf32>
    %122 = arith.addf %114, %121 : vector<8x128xf32>
    %c1_i32_30 = arith.constant 1 : i32
    %123 = tpu.dynamic_rotate %101 by %c1_i32_30 dim 1 : vector<8x128xf32>, i32 -> vector<8x128xf32>
    %124 = vector.broadcast %59 : vector<1x128xf32> to vector<8x128xf32>
    %125 = arith.mulf %123, %124 : vector<8x128xf32>
    %126 = vector.extract_strided_slice %94 {offsets = [0, 3], sizes = [8, 1], strides = [1, 1]} : vector<8x9xf32> to vector<8x1xf32>
    %127 = vector.broadcast %126 : vector<8x1xf32> to vector<8x128xf32>
    %128 = arith.mulf %125, %127 : vector<8x128xf32>
    %129 = arith.addf %122, %128 : vector<8x128xf32>
    %130 = vector.extract_strided_slice %94 {offsets = [0, 4], sizes = [8, 1], strides = [1, 1]} : vector<8x9xf32> to vector<8x1xf32>
    %131 = vector.broadcast %130 : vector<8x1xf32> to vector<8x128xf32>
    %132 = arith.mulf %101, %131 : vector<8x128xf32>
    %133 = arith.addf %129, %132 : vector<8x128xf32>
    %c127_i32 = arith.constant 127 : i32
    %134 = tpu.dynamic_rotate %101 by %c127_i32 dim 1 : vector<8x128xf32>, i32 -> vector<8x128xf32>
    %c5 = arith.constant 5 : index
    %c0_31 = arith.constant 0 : index
    %135 = vector.load %arg2[%c5, %c0_31] : memref<9x128xf32, #tpu.memory_space<vmem>>, vector<1x128xf32>
    %136 = vector.broadcast %135 : vector<1x128xf32> to vector<8x128xf32>
    %137 = arith.mulf %134, %136 : vector<8x128xf32>
    %138 = vector.extract_strided_slice %94 {offsets = [0, 5], sizes = [8, 1], strides = [1, 1]} : vector<8x9xf32> to vector<8x1xf32>
    %139 = vector.broadcast %138 : vector<8x1xf32> to vector<8x128xf32>
    %140 = arith.mulf %137, %139 : vector<8x128xf32>
    %141 = arith.addf %133, %140 : vector<8x128xf32>
    %c121_i32 = arith.constant 121 : i32
    %142 = tpu.dynamic_rotate %101 by %c121_i32 dim 1 : vector<8x128xf32>, i32 -> vector<8x128xf32>
    %c6 = arith.constant 6 : index
    %c0_32 = arith.constant 0 : index
    %143 = vector.load %arg2[%c6, %c0_32] : memref<9x128xf32, #tpu.memory_space<vmem>>, vector<1x128xf32>
    %144 = vector.broadcast %143 : vector<1x128xf32> to vector<8x128xf32>
    %145 = arith.mulf %142, %144 : vector<8x128xf32>
    %146 = vector.extract_strided_slice %94 {offsets = [0, 6], sizes = [8, 1], strides = [1, 1]} : vector<8x9xf32> to vector<8x1xf32>
    %147 = vector.broadcast %146 : vector<8x1xf32> to vector<8x128xf32>
    %148 = arith.mulf %145, %147 : vector<8x128xf32>
    %149 = arith.addf %141, %148 : vector<8x128xf32>
    %c120_i32 = arith.constant 120 : i32
    %150 = tpu.dynamic_rotate %101 by %c120_i32 dim 1 : vector<8x128xf32>, i32 -> vector<8x128xf32>
    %c7 = arith.constant 7 : index
    %c0_33 = arith.constant 0 : index
    %151 = vector.load %arg2[%c7, %c0_33] : memref<9x128xf32, #tpu.memory_space<vmem>>, vector<1x128xf32>
    %152 = vector.broadcast %151 : vector<1x128xf32> to vector<8x128xf32>
    %153 = arith.mulf %150, %152 : vector<8x128xf32>
    %154 = vector.extract_strided_slice %94 {offsets = [0, 7], sizes = [8, 1], strides = [1, 1]} : vector<8x9xf32> to vector<8x1xf32>
    %155 = vector.broadcast %154 : vector<8x1xf32> to vector<8x128xf32>
    %156 = arith.mulf %153, %155 : vector<8x128xf32>
    %157 = arith.addf %149, %156 : vector<8x128xf32>
    %c119_i32 = arith.constant 119 : i32
    %158 = tpu.dynamic_rotate %101 by %c119_i32 dim 1 : vector<8x128xf32>, i32 -> vector<8x128xf32>
    %c8_34 = arith.constant 8 : index
    %c0_35 = arith.constant 0 : index
    %159 = vector.load %arg2[%c8_34, %c0_35] : memref<9x128xf32, #tpu.memory_space<vmem>>, vector<1x128xf32>
    %160 = vector.broadcast %159 : vector<1x128xf32> to vector<8x128xf32>
    %161 = arith.mulf %158, %160 : vector<8x128xf32>
    %162 = vector.extract_strided_slice %94 {offsets = [0, 8], sizes = [8, 1], strides = [1, 1]} : vector<8x9xf32> to vector<8x1xf32>
    %163 = vector.broadcast %162 : vector<8x1xf32> to vector<8x128xf32>
    %164 = arith.mulf %161, %163 : vector<8x128xf32>
    %165 = arith.addf %157, %164 : vector<8x128xf32>
    %166 = vector.extract_strided_slice %90 {offsets = [8, 0], sizes = [16, 128], strides = [1, 1]} : vector<24x128xf32> to vector<16x128xf32>
    %c0_36 = arith.constant 0 : index
    %c0_37 = arith.constant 0 : index
    %167 = vector.load %arg4[%c0_36, %c0_37] : memref<16x8xf32, #tpu.memory_space<vmem>>, vector<16x8xf32>
    %cst_38 = arith.constant dense<0.000000e+00> : vector<16x128xf32>
    %168 = tpu.matmul %167, %165, %cst_38 {dimension_numbers = #tpu.dot_dimension_numbers<[1], [0], [0], [1], [0, 0, 1, 1], [], []>} : vector<16x8xf32>, vector<8x128xf32>, vector<16x128xf32> -> vector<16x128xf32>
    %169 = arith.addf %166, %168 : vector<16x128xf32>
    %c16 = arith.constant 16 : index
    %c0_39 = arith.constant 0 : index
    %170 = vector.load %arg1[%c16, %c0_39] : memref<24x11xf32, #tpu.memory_space<vmem>>, vector<8x11xf32>
    %171 = vector.extract_strided_slice %170 {offsets = [0, 0], sizes = [8, 1], strides = [1, 1]} : vector<8x11xf32> to vector<8x1xf32>
    %172 = vector.extract_strided_slice %170 {offsets = [0, 1], sizes = [8, 1], strides = [1, 1]} : vector<8x11xf32> to vector<8x1xf32>
    %173 = vector.extract_strided_slice %170 {offsets = [0, 2], sizes = [8, 9], strides = [1, 1]} : vector<8x11xf32> to vector<8x9xf32>
    %174 = vector.extract_strided_slice %169 {offsets = [0, 0], sizes = [8, 128], strides = [1, 1]} : vector<16x128xf32> to vector<8x128xf32>
    %175 = vector.broadcast %171 : vector<8x1xf32> to vector<8x128xf32>
    %176 = arith.mulf %174, %175 : vector<8x128xf32>
    %177 = vector.broadcast %172 : vector<8x1xf32> to vector<8x128xf32>
    %178 = arith.addf %176, %177 : vector<8x128xf32>
    %cst_40 = arith.constant 0.000000e+00 : f32
    %179 = vector.broadcast %cst_40 : f32 to vector<8x128xf32>
    %180 = arith.maximumf %178, %179 : vector<8x128xf32>
    %c9_i32_41 = arith.constant 9 : i32
    %181 = tpu.dynamic_rotate %180 by %c9_i32_41 dim 1 : vector<8x128xf32>, i32 -> vector<8x128xf32>
    %182 = vector.broadcast %37 : vector<1x128xf32> to vector<8x128xf32>
    %183 = arith.mulf %181, %182 : vector<8x128xf32>
    %184 = vector.extract_strided_slice %173 {offsets = [0, 0], sizes = [8, 1], strides = [1, 1]} : vector<8x9xf32> to vector<8x1xf32>
    %185 = vector.broadcast %184 : vector<8x1xf32> to vector<8x128xf32>
    %186 = arith.mulf %183, %185 : vector<8x128xf32>
    %c8_i32_42 = arith.constant 8 : i32
    %187 = tpu.dynamic_rotate %180 by %c8_i32_42 dim 1 : vector<8x128xf32>, i32 -> vector<8x128xf32>
    %188 = vector.broadcast %44 : vector<1x128xf32> to vector<8x128xf32>
    %189 = arith.mulf %187, %188 : vector<8x128xf32>
    %190 = vector.extract_strided_slice %173 {offsets = [0, 1], sizes = [8, 1], strides = [1, 1]} : vector<8x9xf32> to vector<8x1xf32>
    %191 = vector.broadcast %190 : vector<8x1xf32> to vector<8x128xf32>
    %192 = arith.mulf %189, %191 : vector<8x128xf32>
    %193 = arith.addf %186, %192 : vector<8x128xf32>
    %c7_i32_43 = arith.constant 7 : i32
    %194 = tpu.dynamic_rotate %180 by %c7_i32_43 dim 1 : vector<8x128xf32>, i32 -> vector<8x128xf32>
    %195 = vector.broadcast %116 : vector<1x128xf32> to vector<8x128xf32>
    %196 = arith.mulf %194, %195 : vector<8x128xf32>
    %197 = vector.extract_strided_slice %173 {offsets = [0, 2], sizes = [8, 1], strides = [1, 1]} : vector<8x9xf32> to vector<8x1xf32>
    %198 = vector.broadcast %197 : vector<8x1xf32> to vector<8x128xf32>
    %199 = arith.mulf %196, %198 : vector<8x128xf32>
    %200 = arith.addf %193, %199 : vector<8x128xf32>
    %c1_i32_44 = arith.constant 1 : i32
    %201 = tpu.dynamic_rotate %180 by %c1_i32_44 dim 1 : vector<8x128xf32>, i32 -> vector<8x128xf32>
    %202 = vector.broadcast %59 : vector<1x128xf32> to vector<8x128xf32>
    %203 = arith.mulf %201, %202 : vector<8x128xf32>
    %204 = vector.extract_strided_slice %173 {offsets = [0, 3], sizes = [8, 1], strides = [1, 1]} : vector<8x9xf32> to vector<8x1xf32>
    %205 = vector.broadcast %204 : vector<8x1xf32> to vector<8x128xf32>
    %206 = arith.mulf %203, %205 : vector<8x128xf32>
    %207 = arith.addf %200, %206 : vector<8x128xf32>
    %208 = vector.extract_strided_slice %173 {offsets = [0, 4], sizes = [8, 1], strides = [1, 1]} : vector<8x9xf32> to vector<8x1xf32>
    %209 = vector.broadcast %208 : vector<8x1xf32> to vector<8x128xf32>
    %210 = arith.mulf %180, %209 : vector<8x128xf32>
    %211 = arith.addf %207, %210 : vector<8x128xf32>
    %c127_i32_45 = arith.constant 127 : i32
    %212 = tpu.dynamic_rotate %180 by %c127_i32_45 dim 1 : vector<8x128xf32>, i32 -> vector<8x128xf32>
    %213 = vector.broadcast %135 : vector<1x128xf32> to vector<8x128xf32>
    %214 = arith.mulf %212, %213 : vector<8x128xf32>
    %215 = vector.extract_strided_slice %173 {offsets = [0, 5], sizes = [8, 1], strides = [1, 1]} : vector<8x9xf32> to vector<8x1xf32>
    %216 = vector.broadcast %215 : vector<8x1xf32> to vector<8x128xf32>
    %217 = arith.mulf %214, %216 : vector<8x128xf32>
    %218 = arith.addf %211, %217 : vector<8x128xf32>
    %c121_i32_46 = arith.constant 121 : i32
    %219 = tpu.dynamic_rotate %180 by %c121_i32_46 dim 1 : vector<8x128xf32>, i32 -> vector<8x128xf32>
    %220 = vector.broadcast %143 : vector<1x128xf32> to vector<8x128xf32>
    %221 = arith.mulf %219, %220 : vector<8x128xf32>
    %222 = vector.extract_strided_slice %173 {offsets = [0, 6], sizes = [8, 1], strides = [1, 1]} : vector<8x9xf32> to vector<8x1xf32>
    %223 = vector.broadcast %222 : vector<8x1xf32> to vector<8x128xf32>
    %224 = arith.mulf %221, %223 : vector<8x128xf32>
    %225 = arith.addf %218, %224 : vector<8x128xf32>
    %c120_i32_47 = arith.constant 120 : i32
    %226 = tpu.dynamic_rotate %180 by %c120_i32_47 dim 1 : vector<8x128xf32>, i32 -> vector<8x128xf32>
    %227 = vector.broadcast %151 : vector<1x128xf32> to vector<8x128xf32>
    %228 = arith.mulf %226, %227 : vector<8x128xf32>
    %229 = vector.extract_strided_slice %173 {offsets = [0, 7], sizes = [8, 1], strides = [1, 1]} : vector<8x9xf32> to vector<8x1xf32>
    %230 = vector.broadcast %229 : vector<8x1xf32> to vector<8x128xf32>
    %231 = arith.mulf %228, %230 : vector<8x128xf32>
    %232 = arith.addf %225, %231 : vector<8x128xf32>
    %c119_i32_48 = arith.constant 119 : i32
    %233 = tpu.dynamic_rotate %180 by %c119_i32_48 dim 1 : vector<8x128xf32>, i32 -> vector<8x128xf32>
    %234 = vector.broadcast %159 : vector<1x128xf32> to vector<8x128xf32>
    %235 = arith.mulf %233, %234 : vector<8x128xf32>
    %236 = vector.extract_strided_slice %173 {offsets = [0, 8], sizes = [8, 1], strides = [1, 1]} : vector<8x9xf32> to vector<8x1xf32>
    %237 = vector.broadcast %236 : vector<8x1xf32> to vector<8x128xf32>
    %238 = arith.mulf %235, %237 : vector<8x128xf32>
    %239 = arith.addf %232, %238 : vector<8x128xf32>
    %240 = vector.extract_strided_slice %169 {offsets = [8, 0], sizes = [8, 128], strides = [1, 1]} : vector<16x128xf32> to vector<8x128xf32>
    %c0_49 = arith.constant 0 : index
    %c0_50 = arith.constant 0 : index
    %241 = vector.load %arg5[%c0_49, %c0_50] : memref<8x8xf32, #tpu.memory_space<vmem>>, vector<8x8xf32>
    %cst_51 = arith.constant dense<0.000000e+00> : vector<8x128xf32>
    %242 = tpu.matmul %241, %239, %cst_51 {dimension_numbers = #tpu.dot_dimension_numbers<[1], [0], [0], [1], [0, 0, 1, 1], [], []>} : vector<8x8xf32>, vector<8x128xf32>, vector<8x128xf32> -> vector<8x128xf32>
    %243 = arith.addf %240, %242 : vector<8x128xf32>
    %c0_52 = arith.constant 0 : index
    %c0_53 = arith.constant 0 : index
    %244 = vector.load %arg6[%c0_52, %c0_53] : memref<8x128xf32, #tpu.memory_space<vmem>>, vector<8x128xf32>
    tpu.vector_store %arg6[%c0_52, %c0_53], %243 {strides = array<i32>} : memref<8x128xf32, #tpu.memory_space<vmem>>, vector<8x128xf32>,
    return
  }
}

</mosaic_0001>

<llo_original>
// kernel: tpu_custom_call.1
$region0: #{tpu_custom_call.1}
  #allocation0 [shape = 'u32[]', space=smem, size = 0x4, offset = 0x4, fixed_abs, tag = 'smem constant byte address 0x4 - core index']
  #allocation1 [shape = 'u32[144,128]{1,0:T(1,128)}', space=vmem, size = 0x12000, scoped, tag = 'internal scratch']
  %s0 = inlined_call_operand.vmem [shape: f32[4,8,128], index: 0, kind: input, shape index: {}]
  %s1 = inlined_call_operand.vmem [shape: f32[24,11], index: 1, kind: input, shape index: {}]
  %s2 = inlined_call_operand.vmem [shape: f32[9,128], index: 2, kind: input, shape index: {}]
  %s3 = inlined_call_operand.vmem [shape: f32[24,8], index: 3, kind: input, shape index: {}]
  %s4 = inlined_call_operand.vmem [shape: f32[16,8], index: 4, kind: input, shape index: {}]
  %s5 = inlined_call_operand.vmem [shape: f32[8,8], index: 5, kind: input, shape index: {}]
  %s6 = inlined_call_operand.hbm [shape: f32[8,128], index: 6, kind: output, shape index: {}]
  %s7 = sld [smem:[#allocation0]]
  $region34: #{tpu_custom_call.1} parent=0
    _
  %s9 = ssub.s32 1, %s7
  %s10 = scalar_select 0, %s9, %s7
  $region1: #{tpu_custom_call.1} parent=0
    #allocation2 [shape = 'u8[4096]{0}', space=vmem, size = 0x1000, scoped, tag = 'output window, operand 0, single buffered']
    #allocation3 [shape = 's32[1]{0}', space=sflag, size = 0x4, scoped, tag = 'scoped memory for tpu_custom_call.1']
    %11 = vsyncpa [#allocation3], 0
    // Predicated region
    $region2: #{tpu_custom_call.1} parent=1 // pred_check
      _
    $region3: #{tpu_custom_call.1} parent=1 // pred_check_branch
      %13 = sbr.rel (0) target = $region5
    $region4: #{tpu_custom_call.1} parent=1 // pred_region
      _
    $region5: #{tpu_custom_call.1} parent=1 // pred_fallthru
      _
    // Predicated region
    $region6: #{tpu_custom_call.1} parent=1 // pred_check
      _
    $region7: #{tpu_custom_call.1} parent=1 // pred_check_branch
      %15 = sbr.rel (0) target = $region9
    $region8: #{tpu_custom_call.1} parent=1 // pred_region
      _
    $region9: #{tpu_custom_call.1} parent=1 // pred_fallthru
      _
    // Predicated region
    $region10: #{tpu_custom_call.1} parent=1 // pred_check
      _
    $region11: #{tpu_custom_call.1} parent=1 // pred_check_branch
      %17 = sbr.rel (0) target = $region13
    $region12: #{tpu_custom_call.1} parent=1 // pred_region
      _
    $region13: #{tpu_custom_call.1} parent=1 // pred_fallthru
      _
    // Predicated region
    $region14: #{tpu_custom_call.1} parent=1 // pred_check
      _
    $region15: #{tpu_custom_call.1} parent=1 // pred_check_branch
      %19 = sbr.rel (0) target = $region17
    $region16: #{tpu_custom_call.1} parent=1 // pred_region
      _
    $region17: #{tpu_custom_call.1} parent=1 // pred_fallthru
      _
    // Predicated region
    $region18: #{tpu_custom_call.1} parent=1 // pred_check
      _
    $region19: #{tpu_custom_call.1} parent=1 // pred_check_branch
      %21 = sbr.rel (0) target = $region21
    $region20: #{tpu_custom_call.1} parent=1 // pred_region
      _
    $region21: #{tpu_custom_call.1} parent=1 // pred_fallthru
      _
    // Predicated region
    $region22: #{tpu_custom_call.1} parent=1 // pred_check
      _
    $region23: #{tpu_custom_call.1} parent=1 // pred_check_branch
      %23 = sbr.rel (0) target = $region25
    $region24: #{tpu_custom_call.1} parent=1 // pred_region
      _
    $region25: #{tpu_custom_call.1} parent=1 // pred_fallthru
      _
    %v24 = vld [vmem:[%s1] sm:$0xff]
    %v25 = vld [vmem:[%s0] sm:$0xff]
    %27 = vset.pattern.permute.xlu0 0
    %28 = vperm.xlu0 %27, %v24
    %v29 = vpop.permute.xlu0 %28
    %v31 = vmul.f32 %v25, %v29
    %32 = vset.pattern.permute.xlu0 1
    %33 = vperm.xlu0 %32, %v24
    %v34 = vpop.permute.xlu0 %33
    %v36 = vadd.f32 %v31, %v34
    %v37 = vmax.f32 %v36, 0.0
    %s38 = scalar_lea.vmem %s0, 8
    %v39 = vld [vmem:[%s38] sm:$0xff]
    %v40 = vmul.f32 %v39, %v29
    %v41 = vadd.f32 %v40, %v34
    %v42 = vmax.f32 %v41, 0.0
    %s43 = scalar_lea.vmem %s0, 16
    %v44 = vld [vmem:[%s43] sm:$0xff]
    %v45 = vmul.f32 %v44, %v29
    %v46 = vadd.f32 %v45, %v34
    %v47 = vmax.f32 %v46, 0.0
    %s48 = scalar_lea.vmem %s0, 24
    %v49 = vld [vmem:[%s48] sm:$0xff]
    %v50 = vmul.f32 %v49, %v29
    %v51 = vadd.f32 %v50, %v34
    %v52 = vmax.f32 %v51, 0.0
    %53 = vrot.lane.b32.xlu0 %v52, 9
    %v54 = vpop.permute.xlu0 %53
    %v55 = vld [vmem:[%s2] sm:$0x1]
    %v56 = vlaneseq
    %v57 = vshrl.u32 %v56, 7
    %v58 = vsub.s32 0, %v57
    %v59 = vrot.slane %v55, %v58
    %v60 = vmul.f32 %v54, %v59
    %61 = vset.pattern.permute.xlu0 2
    %62 = vperm.xlu0 %61, %v24
    %v63 = vpop.permute.xlu0 %62
    %v65 = vmul.f32 %v60, %v63
    %66 = vrot.lane.b32.xlu0 %v47, 8
    %v67 = vpop.permute.xlu0 %66
    %v68 = vld [vmem:[%s2 + $0x1] sm:$0x1]
    %v69 = vlaneseq
    %v70 = vshrl.u32 %v69, 7
    %v71 = vsub.s32 0, %v70
    %v72 = vrot.slane %v68, %v71
    %v73 = vmul.f32 %v67, %v72
    %74 = vset.pattern.permute.xlu0 3
    %75 = vperm.xlu0 %74, %v24
    %v76 = vpop.permute.xlu0 %75
    %v78 = vmul.f32 %v73, %v76
    %v79 = vadd.f32 %v65, %v78
    %80 = vrot.lane.b32.xlu0 %v52, 8
    %v81 = vpop.permute.xlu0 %80
    %v82 = vmul.f32 %v81, %v72
    %83 = vset.pattern.permute.xlu0 4
    %84 = vperm.xlu0 %83, %v24
    %v85 = vpop.permute.xlu0 %84
    %v87 = vmul.f32 %v82, %v85
    %v88 = vadd.f32 %v79, %v87
    %89 = vrot.lane.b32.xlu0 %v42, 1
    %v90 = vpop.permute.xlu0 %89
    %v91 = vld [vmem:[%s2 + $0x3] sm:$0x1]
    %v92 = vlaneseq
    %v93 = vshrl.u32 %v92, 7
    %v94 = vsub.s32 0, %v93
    %v95 = vrot.slane %v91, %v94
    %v96 = vmul.f32 %v90, %v95
    %97 = vset.pattern.permute.xlu0 5
    %98 = vperm.xlu0 %97, %v24
    %v99 = vpop.permute.xlu0 %98
    %v101 = vmul.f32 %v96, %v99
    %v102 = vadd.f32 %v88, %v101
    %103 = vset.pattern.permute.xlu0 6
    %104 = vperm.xlu0 %103, %v24
    %v105 = vpop.permute.xlu0 %104
    %v107 = vmul.f32 %v37, %v105
    %v108 = vadd.f32 %v102, %v107
    %109 = vset.pattern.permute.xlu0 7
    %110 = vperm.xlu0 %109, %v24
    %v111 = vpop.permute.xlu0 %110
    %v113 = vmul.f32 %v42, %v111
    %v114 = vadd.f32 %v108, %v113
    %115 = vrot.lane.b32.xlu0 %v52, 1
    %v116 = vpop.permute.xlu0 %115
    %v117 = vmul.f32 %v116, %v95
    %118 = vset.pattern.permute.xlu0 8
    %119 = vperm.xlu0 %118, %v24
    %v120 = vpop.permute.xlu0 %119
    %v122 = vmul.f32 %v117, %v120
    %v123 = vadd.f32 %v114, %v122
    %124 = vset.pattern.permute.xlu0 9
    %125 = vperm.xlu0 %124, %v24
    %v126 = vpop.permute.xlu0 %125
    %v128 = vmul.f32 %v47, %v126
    %v129 = vadd.f32 %v123, %v128
    %130 = vset.pattern.permute.xlu0 10
    %131 = vperm.xlu0 %130, %v24
    %v132 = vpop.permute.xlu0 %131
    %v134 = vmul.f32 %v52, %v132
    %v135 = vadd.f32 %v129, %v134
    %v136 = vld [vmem:[%s3] sm:$0xff]
    %v137 = vld [vmem:[%s3 + $0x8] sm:$0xff]
    %v138 = vld [vmem:[%s3 + $0x10] sm:$0xff]
    %vm139 = vcmask 64512
    %v141 = vsel %vm139, %v136, 0
    %v144 = vsel %vm139, %v137, 0
    %v147 = vsel %vm139, %v138, 0
    %149 = vmatprep.subr.mxu0 0.0
    %150 = vmatpush1.msra.mxu0 %v135
    %151 = vmatprep.subr.mxu0 0.0
    %152 = vmatpush1.msra.mxu0 0.0
    %153 = vmatprep.subr.mxu0 0.0
    %154 = vmatpush1.msra.mxu0 0.0
    %155 = vmatprep.subr.mxu0 0.0
    %156 = vmatpush1.msra.mxu0 0.0
    %157 = vmatprep.subr.mxu0 0.0
    %158 = vmatpush1.msra.mxu0 0.0
    %159 = vmatprep.subr.mxu0 0.0
    %160 = vmatpush1.msra.mxu0 0.0
    %161 = vmatprep.subr.mxu0 0.0
    %162 = vmatpush1.msra.mxu0 0.0
    %163 = vmatprep.subr.mxu0 0.0
    %164 = vmatpush1.msra.mxu0 0.0
    %165 = vmatprep.subr.mxu0 0.0
    %166 = vmatpush1.msra.mxu0 0.0
    %167 = vmatprep.subr.mxu0 0.0
    %168 = vmatpush1.msra.mxu0 0.0
    %169 = vmatprep.subr.mxu0 0.0
    %170 = vmatpush1.msra.mxu0 0.0
    %171 = vmatprep.subr.mxu0 0.0
    %172 = vmatpush1.msra.mxu0 0.0
    %173 = vmatprep.subr.mxu0 0.0
    %174 = vmatpush1.msra.mxu0 0.0
    %175 = vmatprep.subr.mxu0 0.0
    %176 = vmatpush1.msra.mxu0 0.0
    %177 = vmatprep.subr.mxu0 0.0
    %178 = vmatpush1.msra.mxu0 0.0
    %179 = vmatprep.subr.mxu0 0.0
    %180 = vmatpush1.msra.mxu0 0.0
    %181 = vmatprep.subr.mxu0 0.0
    %182 = vmatpush1.msra.mxu0 0.0
    %183 = vmatprep.subr.mxu0 0.0
    %184 = vmatpush1.msra.mxu0 0.0
    %185 = vmatprep.subr.mxu0 0.0
    %186 = vmatpush1.msra.mxu0 0.0
    %187 = vmatprep.subr.mxu0 0.0
    %188 = vmatpush1.msra.mxu0 0.0
    %189 = vmatprep.subr.mxu0 0.0
    %190 = vmatpush1.msra.mxu0 0.0
    %191 = vmatprep.subr.mxu0 0.0
    %192 = vmatpush1.msra.mxu0 0.0
    %193 = vmatprep.subr.mxu0 0.0
    %194 = vmatpush1.msra.mxu0 0.0
    %195 = vmatprep.subr.mxu0 0.0
    %196 = vmatpush1.msra.mxu0 0.0
    %197 = vmatprep.subr.mxu0 0.0
    %198 = vmatpush1.msra.mxu0 0.0
    %199 = vmatprep.subr.mxu0 0.0
    %200 = vmatpush1.msra.mxu0 0.0
    %201 = vmatprep.subr.mxu0 0.0
    %202 = vmatpush1.msra.mxu0 0.0
    %203 = vmatprep.subr.mxu0 0.0
    %204 = vmatpush1.msra.mxu0 0.0
    %205 = vmatprep.subr.mxu0 0.0
    %206 = vmatpush1.msra.mxu0 0.0
    %207 = vmatprep.subr.mxu0 0.0
    %208 = vmatpush1.msra.mxu0 0.0
    %209 = vmatprep.subr.mxu0 0.0
    %210 = vmatpush1.msra.mxu0 0.0
    %211 = vmatprep.subr.mxu0 0.0
    %212 = vmatpush1.msra.mxu0 0.0
    %213 = vmatprep.mubr.f32.mxu0 0.0
    %214 = vmatmul.mubr.f32.gmra.mrb[0].mxu0 %v141
    %v215 = vpop.f32.mrb[0].mxu0
    %v216 = vadd.f32 0.0, %v215
    %v217 = vpop.f32.mrb[0].mxu0
    %218 = vmatprep.mubr.f32.mxu0 0.0
    %219 = vmatmul.mubr.f32.gmra.mrb[0].mxu0 %v144
    %v220 = vpop.f32.mrb[0].mxu0
    %v221 = vadd.f32 0.0, %v220
    %v222 = vpop.f32.mrb[0].mxu0
    %223 = vmatprep.mubr.f32.mxu0 0.0
    %224 = vmatmul.mubr.f32.gmra.mrb[0].mxu0 %v147
    %v225 = vpop.f32.mrb[0].mxu0
    %v226 = vadd.f32 0.0, %v225
    %v227 = vpop.f32.mrb[0].mxu0
    %228 = vdwg.mxu0
    %v229 = vld [vmem:[%s1 + $0x8] sm:$0xff]
    %231 = vset.pattern.permute.xlu0 0
    %232 = vperm.xlu0 %231, %v229
    %v233 = vpop.permute.xlu0 %232
    %v235 = vmul.f32 %v216, %v233
    %236 = vset.pattern.permute.xlu0 1
    %237 = vperm.xlu0 %236, %v229
    %v238 = vpop.permute.xlu0 %237
    %v240 = vadd.f32 %v235, %v238
    %v241 = vmax.f32 %v240, 0.0
    %242 = vrot.lane.b32.xlu0 %v241, 9
    %v243 = vpop.permute.xlu0 %242
    %v244 = vmul.f32 %v243, %v59
    %245 = vset.pattern.permute.xlu0 2
    %246 = vperm.xlu0 %245, %v229
    %v247 = vpop.permute.xlu0 %246
    %v249 = vmul.f32 %v244, %v247
    %250 = vrot.lane.b32.xlu0 %v241, 8
    %v251 = vpop.permute.xlu0 %250
    %v252 = vmul.f32 %v251, %v72
    %253 = vset.pattern.permute.xlu0 3
    %254 = vperm.xlu0 %253, %v229
    %v255 = vpop.permute.xlu0 %254
    %v257 = vmul.f32 %v252, %v255
    %v258 = vadd.f32 %v249, %v257
    %259 = vrot.lane.b32.xlu0 %v241, 7
    %v260 = vpop.permute.xlu0 %259
    %v261 = vld [vmem:[%s2 + $0x2] sm:$0x1]
    %v262 = vlaneseq
    %v263 = vshrl.u32 %v262, 7
    %v264 = vsub.s32 0, %v263
    %v265 = vrot.slane %v261, %v264
    %v266 = vmul.f32 %v260, %v265
    %267 = vset.pattern.permute.xlu0 4
    %268 = vperm.xlu0 %267, %v229
    %v269 = vpop.permute.xlu0 %268
    %v271 = vmul.f32 %v266, %v269
    %v272 = vadd.f32 %v258, %v271
    %273 = vrot.lane.b32.xlu0 %v241, 1
    %v274 = vpop.permute.xlu0 %273
    %v275 = vmul.f32 %v274, %v95
    %276 = vset.pattern.permute.xlu0 5
    %277 = vperm.xlu0 %276, %v229
    %v278 = vpop.permute.xlu0 %277
    %v280 = vmul.f32 %v275, %v278
    %v281 = vadd.f32 %v272, %v280
    %282 = vset.pattern.permute.xlu0 6
    %283 = vperm.xlu0 %282, %v229
    %v284 = vpop.permute.xlu0 %283
    %v286 = vmul.f32 %v241, %v284
    %v287 = vadd.f32 %v281, %v286
    %288 = vrot.lane.b32.xlu0 %v241, 127
    %v289 = vpop.permute.xlu0 %288
    %v290 = vld [vmem:[%s2 + $0x5] sm:$0x1]
    %v291 = vlaneseq
    %v292 = vshrl.u32 %v291, 7
    %v293 = vsub.s32 0, %v292
    %v294 = vrot.slane %v290, %v293
    %v295 = vmul.f32 %v289, %v294
    %296 = vset.pattern.permute.xlu0 7
    %297 = vperm.xlu0 %296, %v229
    %v298 = vpop.permute.xlu0 %297
    %v300 = vmul.f32 %v295, %v298
    %v301 = vadd.f32 %v287, %v300
    %302 = vrot.lane.b32.xlu0 %v241, 121
    %v303 = vpop.permute.xlu0 %302
    %v304 = vld [vmem:[%s2 + $0x6] sm:$0x1]
    %v305 = vlaneseq
    %v306 = vshrl.u32 %v305, 7
    %v307 = vsub.s32 0, %v306
    %v308 = vrot.slane %v304, %v307
    %v309 = vmul.f32 %v303, %v308
    %310 = vset.pattern.permute.xlu0 8
    %311 = vperm.xlu0 %310, %v229
    %v312 = vpop.permute.xlu0 %311
    %v314 = vmul.f32 %v309, %v312
    %v315 = vadd.f32 %v301, %v314
    %316 = vrot.lane.b32.xlu0 %v241, 120
    %v317 = vpop.permute.xlu0 %316
    %v318 = vld [vmem:[%s2 + $0x7] sm:$0x1]
    %v319 = vlaneseq
    %v320 = vshrl.u32 %v319, 7
    %v321 = vsub.s32 0, %v320
    %v322 = vrot.slane %v318, %v321
    %v323 = vmul.f32 %v317, %v322
    %324 = vset.pattern.permute.xlu0 9
    %325 = vperm.xlu0 %324, %v229
    %v326 = vpop.permute.xlu0 %325
    %v328 = vmul.f32 %v323, %v326
    %v329 = vadd.f32 %v315, %v328
    %330 = vrot.lane.b32.xlu0 %v241, 119
    %v331 = vpop.permute.xlu0 %330
    %v332 = vld [vmem:[%s2 + $0x8] sm:$0x1]
    %v333 = vlaneseq
    %v334 = vshrl.u32 %v333, 7
    %v335 = vsub.s32 0, %v334
    %v336 = vrot.slane %v332, %v335
    %v337 = vmul.f32 %v331, %v336
    %338 = vset.pattern.permute.xlu0 10
    %339 = vperm.xlu0 %338, %v229
    %v340 = vpop.permute.xlu0 %339
    %v342 = vmul.f32 %v337, %v340
    %v343 = vadd.f32 %v329, %v342
    %v344 = vld [vmem:[%s4] sm:$0xff]
    %v345 = vld [vmem:[%s4 + $0x8] sm:$0xff]
    %v347 = vsel %vm139, %v344, 0
    %v350 = vsel %vm139, %v345, 0
    %352 = vmatprep.subr.mxu0 0.0
    %353 = vmatpush1.msra.mxu0 %v343
    %354 = vmatprep.subr.mxu0 0.0
    %355 = vmatpush1.msra.mxu0 0.0
    %356 = vmatprep.subr.mxu0 0.0
    %357 = vmatpush1.msra.mxu0 0.0
    %358 = vmatprep.subr.mxu0 0.0
    %359 = vmatpush1.msra.mxu0 0.0
    %360 = vmatprep.subr.mxu0 0.0
    %361 = vmatpush1.msra.mxu0 0.0
    %362 = vmatprep.subr.mxu0 0.0
    %363 = vmatpush1.msra.mxu0 0.0
    %364 = vmatprep.subr.mxu0 0.0
    %365 = vmatpush1.msra.mxu0 0.0
    %366 = vmatprep.subr.mxu0 0.0
    %367 = vmatpush1.msra.mxu0 0.0
    %368 = vmatprep.subr.mxu0 0.0
    %369 = vmatpush1.msra.mxu0 0.0
    %370 = vmatprep.subr.mxu0 0.0
    %371 = vmatpush1.msra.mxu0 0.0
    %372 = vmatprep.subr.mxu0 0.0
    %373 = vmatpush1.msra.mxu0 0.0
    %374 = vmatprep.subr.mxu0 0.0
    %375 = vmatpush1.msra.mxu0 0.0
    %376 = vmatprep.subr.mxu0 0.0
    %377 = vmatpush1.msra.mxu0 0.0
    %378 = vmatprep.subr.mxu0 0.0
    %379 = vmatpush1.msra.mxu0 0.0
    %380 = vmatprep.subr.mxu0 0.0
    %381 = vmatpush1.msra.mxu0 0.0
    %382 = vmatprep.subr.mxu0 0.0
    %383 = vmatpush1.msra.mxu0 0.0
    %384 = vmatprep.subr.mxu0 0.0
    %385 = vmatpush1.msra.mxu0 0.0
    %386 = vmatprep.subr.mxu0 0.0
    %387 = vmatpush1.msra.mxu0 0.0
    %388 = vmatprep.subr.mxu0 0.0
    %389 = vmatpush1.msra.mxu0 0.0
    %390 = vmatprep.subr.mxu0 0.0
    %391 = vmatpush1.msra.mxu0 0.0
    %392 = vmatprep.subr.mxu0 0.0
    %393 = vmatpush1.msra.mxu0 0.0
    %394 = vmatprep.subr.mxu0 0.0
    %395 = vmatpush1.msra.mxu0 0.0
    %396 = vmatprep.subr.mxu0 0.0
    %397 = vmatpush1.msra.mxu0 0.0
    %398 = vmatprep.subr.mxu0 0.0
    %399 = vmatpush1.msra.mxu0 0.0
    %400 = vmatprep.subr.mxu0 0.0
    %401 = vmatpush1.msra.mxu0 0.0
    %402 = vmatprep.subr.mxu0 0.0
    %403 = vmatpush1.msra.mxu0 0.0
    %404 = vmatprep.subr.mxu0 0.0
    %405 = vmatpush1.msra.mxu0 0.0
    %406 = vmatprep.subr.mxu0 0.0
    %407 = vmatpush1.msra.mxu0 0.0
    %408 = vmatprep.subr.mxu0 0.0
    %409 = vmatpush1.msra.mxu0 0.0
    %410 = vmatprep.subr.mxu0 0.0
    %411 = vmatpush1.msra.mxu0 0.0
    %412 = vmatprep.subr.mxu0 0.0
    %413 = vmatpush1.msra.mxu0 0.0
    %414 = vmatprep.subr.mxu0 0.0
    %415 = vmatpush1.msra.mxu0 0.0
    %416 = vmatprep.mubr.f32.mxu0 0.0
    %417 = vmatmul.mubr.f32.gmra.mrb[0].mxu0 %v347
    %v418 = vpop.f32.mrb[0].mxu0
    %v419 = vadd.f32 0.0, %v418
    %v420 = vpop.f32.mrb[0].mxu0
    %421 = vmatprep.mubr.f32.mxu0 0.0
    %422 = vmatmul.mubr.f32.gmra.mrb[0].mxu0 %v350
    %v423 = vpop.f32.mrb[0].mxu0
    %v424 = vadd.f32 0.0, %v423
    %v425 = vpop.f32.mrb[0].mxu0
    %426 = vdwg.mxu0
    %v427 = vadd.f32 %v221, %v419
    %v428 = vadd.f32 %v226, %v424
    %v429 = vld [vmem:[%s1 + $0x10] sm:$0xff]
    %431 = vset.pattern.permute.xlu0 0
    %432 = vperm.xlu0 %431, %v429
    %v433 = vpop.permute.xlu0 %432
    %v435 = vmul.f32 %v427, %v433
    %436 = vset.pattern.permute.xlu0 1
    %437 = vperm.xlu0 %436, %v429
    %v438 = vpop.permute.xlu0 %437
    %v440 = vadd.f32 %v435, %v438
    %v441 = vmax.f32 %v440, 0.0
    %442 = vrot.lane.b32.xlu0 %v441, 9
    %v443 = vpop.permute.xlu0 %442
    %v444 = vmul.f32 %v443, %v59
    %445 = vset.pattern.permute.xlu0 2
    %446 = vperm.xlu0 %445, %v429
    %v447 = vpop.permute.xlu0 %446
    %v449 = vmul.f32 %v444, %v447
    %450 = vrot.lane.b32.xlu0 %v441, 8
    %v451 = vpop.permute.xlu0 %450
    %v452 = vmul.f32 %v451, %v72
    %453 = vset.pattern.permute.xlu0 3
    %454 = vperm.xlu0 %453, %v429
    %v455 = vpop.permute.xlu0 %454
    %v457 = vmul.f32 %v452, %v455
    %v458 = vadd.f32 %v449, %v457
    %459 = vrot.lane.b32.xlu0 %v441, 7
    %v460 = vpop.permute.xlu0 %459
    %v461 = vmul.f32 %v460, %v265
    %462 = vset.pattern.permute.xlu0 4
    %463 = vperm.xlu0 %462, %v429
    %v464 = vpop.permute.xlu0 %463
    %v466 = vmul.f32 %v461, %v464
    %v467 = vadd.f32 %v458, %v466
    %468 = vrot.lane.b32.xlu0 %v441, 1
    %v469 = vpop.permute.xlu0 %468
    %v470 = vmul.f32 %v469, %v95
    %471 = vset.pattern.permute.xlu0 5
    %472 = vperm.xlu0 %471, %v429
    %v473 = vpop.permute.xlu0 %472
    %v475 = vmul.f32 %v470, %v473
    %v476 = vadd.f32 %v467, %v475
    %477 = vset.pattern.permute.xlu0 6
    %478 = vperm.xlu0 %477, %v429
    %v479 = vpop.permute.xlu0 %478
    %v481 = vmul.f32 %v441, %v479
    %v482 = vadd.f32 %v476, %v481
    %483 = vrot.lane.b32.xlu0 %v441, 127
    %v484 = vpop.permute.xlu0 %483
    %v485 = vmul.f32 %v484, %v294
    %486 = vset.pattern.permute.xlu0 7
    %487 = vperm.xlu0 %486, %v429
    %v488 = vpop.permute.xlu0 %487
    %v490 = vmul.f32 %v485, %v488
    %v491 = vadd.f32 %v482, %v490
    %492 = vrot.lane.b32.xlu0 %v441, 121
    %v493 = vpop.permute.xlu0 %492
    %v494 = vmul.f32 %v493, %v308
    %495 = vset.pattern.permute.xlu0 8
    %496 = vperm.xlu0 %495, %v429
    %v497 = vpop.permute.xlu0 %496
    %v499 = vmul.f32 %v494, %v497
    %v500 = vadd.f32 %v491, %v499
    %501 = vrot.lane.b32.xlu0 %v441, 120
    %v502 = vpop.permute.xlu0 %501
    %v503 = vmul.f32 %v502, %v322
    %504 = vset.pattern.permute.xlu0 9
    %505 = vperm.xlu0 %504, %v429
    %v506 = vpop.permute.xlu0 %505
    %v508 = vmul.f32 %v503, %v506
    %v509 = vadd.f32 %v500, %v508
    %510 = vrot.lane.b32.xlu0 %v441, 119
    %v511 = vpop.permute.xlu0 %510
    %v512 = vmul.f32 %v511, %v336
    %513 = vset.pattern.permute.xlu0 10
    %514 = vperm.xlu0 %513, %v429
    %v515 = vpop.permute.xlu0 %514
    %v517 = vmul.f32 %v512, %v515
    %v518 = vadd.f32 %v509, %v517
    %v519 = vld [vmem:[%s5] sm:$0xff]
    %v521 = vsel %vm139, %v519, 0
    %523 = vmatprep.subr.mxu0 0.0
    %524 = vmatpush1.msra.mxu0 %v518
    %525 = vmatprep.subr.mxu0 0.0
    %526 = vmatpush1.msra.mxu0 0.0
    %527 = vmatprep.subr.mxu0 0.0
    %528 = vmatpush1.msra.mxu0 0.0
    %529 = vmatprep.subr.mxu0 0.0
    %530 = vmatpush1.msra.mxu0 0.0
    %531 = vmatprep.subr.mxu0 0.0
    %532 = vmatpush1.msra.mxu0 0.0
    %533 = vmatprep.subr.mxu0 0.0
    %534 = vmatpush1.msra.mxu0 0.0
    %535 = vmatprep.subr.mxu0 0.0
    %536 = vmatpush1.msra.mxu0 0.0
    %537 = vmatprep.subr.mxu0 0.0
    %538 = vmatpush1.msra.mxu0 0.0
    %539 = vmatprep.subr.mxu0 0.0
    %540 = vmatpush1.msra.mxu0 0.0
    %541 = vmatprep.subr.mxu0 0.0
    %542 = vmatpush1.msra.mxu0 0.0
    %543 = vmatprep.subr.mxu0 0.0
    %544 = vmatpush1.msra.mxu0 0.0
    %545 = vmatprep.subr.mxu0 0.0
    %546 = vmatpush1.msra.mxu0 0.0
    %547 = vmatprep.subr.mxu0 0.0
    %548 = vmatpush1.msra.mxu0 0.0
    %549 = vmatprep.subr.mxu0 0.0
    %550 = vmatpush1.msra.mxu0 0.0
    %551 = vmatprep.subr.mxu0 0.0
    %552 = vmatpush1.msra.mxu0 0.0
    %553 = vmatprep.subr.mxu0 0.0
    %554 = vmatpush1.msra.mxu0 0.0
    %555 = vmatprep.subr.mxu0 0.0
    %556 = vmatpush1.msra.mxu0 0.0
    %557 = vmatprep.subr.mxu0 0.0
    %558 = vmatpush1.msra.mxu0 0.0
    %559 = vmatprep.subr.mxu0 0.0
    %560 = vmatpush1.msra.mxu0 0.0
    %561 = vmatprep.subr.mxu0 0.0
    %562 = vmatpush1.msra.mxu0 0.0
    %563 = vmatprep.subr.mxu0 0.0
    %564 = vmatpush1.msra.mxu0 0.0
    %565 = vmatprep.subr.mxu0 0.0
    %566 = vmatpush1.msra.mxu0 0.0
    %567 = vmatprep.subr.mxu0 0.0
    %568 = vmatpush1.msra.mxu0 0.0
    %569 = vmatprep.subr.mxu0 0.0
    %570 = vmatpush1.msra.mxu0 0.0
    %571 = vmatprep.subr.mxu0 0.0
    %572 = vmatpush1.msra.mxu0 0.0
    %573 = vmatprep.subr.mxu0 0.0
    %574 = vmatpush1.msra.mxu0 0.0
    %575 = vmatprep.subr.mxu0 0.0
    %576 = vmatpush1.msra.mxu0 0.0
    %577 = vmatprep.subr.mxu0 0.0
    %578 = vmatpush1.msra.mxu0 0.0
    %579 = vmatprep.subr.mxu0 0.0
    %580 = vmatpush1.msra.mxu0 0.0
    %581 = vmatprep.subr.mxu0 0.0
    %582 = vmatpush1.msra.mxu0 0.0
    %583 = vmatprep.subr.mxu0 0.0
    %584 = vmatpush1.msra.mxu0 0.0
    %585 = vmatprep.subr.mxu0 0.0
    %586 = vmatpush1.msra.mxu0 0.0
    %587 = vmatprep.mubr.f32.mxu0 0.0
    %588 = vmatmul.mubr.f32.gmra.mrb[0].mxu0 %v521
    %v589 = vpop.f32.mrb[0].mxu0
    %v590 = vadd.f32 0.0, %v589
    %v591 = vpop.f32.mrb[0].mxu0
    %592 = vdwg.mxu0
    %v593 = vadd.f32 %v428, %v590
    %594 = vst [vmem:[#allocation2] sm:$0xff] %v593
    // Predicated region
    $region26: #{tpu_custom_call.1} parent=1 // pred_check
      _
    $region27: #{tpu_custom_call.1} parent=1 // pred_check_branch
      %596 = sbr.rel (0) target = $region29
    $region28: #{tpu_custom_call.1} parent=1 // pred_region
      %s598 = ssub.s32 128, 128
      %599 = vsyncadd [#allocation3], %s598
      %s601 = sshll.u32 [#allocation2], 4
      %s602 = int_to_ptr.vmem [resolvable:$true] %s601
      %604 = dma.vmem_to_hbm [thread:$0]  %s602, 128, %s6, [#allocation3]
    $region29: #{tpu_custom_call.1} parent=1 // pred_fallthru
      _
    // Predicated region
    $region30: #{tpu_custom_call.1} parent=1 // pred_check
      _
    $region31: #{tpu_custom_call.1} parent=1 // pred_check_branch
      %606 = sbr.rel (0) target = $region33
    $region32: #{tpu_custom_call.1} parent=1 // pred_region
      %607 = dma.done [#allocation3], 128
    $region33: #{tpu_custom_call.1} parent=1 // pred_fallthru
      _
    %608 = vsyncpa [#allocation3], 1

</llo_original>
